<compile_context>
chip_gen: v6e
topology: v6e:2x2x1
jax: 0.10.0
libtpu: 0.0.40
codegen_flags: <defaults>
</compile_context>

<pallas_src>
import math

import jax
import jax.numpy as jnp
from jax.experimental import pallas as pl
from jax.experimental.pallas import tpu as pltpu


def _round_up(x, m):
    return ((x + m - 1) // m) * m


def _timestep_embed_kernel(t_ref, f2_ref, phase_ref, o_ref):
    # t_ref:     (TILE_N, 1)       f32  per-row scalar t (streamed)
    # f2_ref:    (1, 2*half)       f32  [freqs | freqs]       (grid-resident)
    # phase_ref: (1, 2*half)       f32  [0 ... | -pi/2 ...]   (grid-resident)
    # o_ref:     (TILE_N, 2*half)  out_dtype
    args = t_ref[...] * f2_ref[...] + phase_ref[...]     # one mul + one add (VPU)
    # Single transcendental pass + single unmasked, lane-dense full-width store.
    o_ref[...] = jnp.cos(args).astype(o_ref.dtype)


def _choose_tile_and_steps(n, row_bytes, vmem_budget_bytes,
                           sublane=8, min_rows_for_split=512):
    """Pick a balanced row tile under a VMEM budget.

    row_bytes = per-row, per-buffer VMEM footprint (output row + lane-padded t
    row). Factor 2 = BlockSpec double buffering.
    """
    max_tile = max(sublane,
                   (vmem_budget_bytes // (2 * row_bytes)) // sublane * sublane)
    steps = -(-n // max_tile)                       # cdiv
    if steps < 2 and n >= min_rows_for_split:
        steps = 2                                   # feed both v7x TensorCores
    tile = _round_up(-(-n // steps), sublane)       # balanced tiles, 8-aligned
    steps = -(-n // tile)
    return tile, steps


def timestep_embedding_pallas(t_flat, outdim, max_period=10000.0,
                              out_dtype=jnp.float32,
                              vmem_budget_bytes=10 * 1024 * 1024):
    """t_flat: (N,) array -> (N, outdim) sinusoidal embedding (cos | sin)."""
    n = int(t_flat.shape[0])
    half = outdim // 2
    width = 2 * half
    out_bytes = jnp.dtype(out_dtype).itemsize

    # Tiny grid-resident tables: duplicated freqs and the cos/sin phase row.
    freqs = jnp.exp(
        -math.log(max_period) * jnp.arange(half, dtype=jnp.float32) / half)
    f2 = jnp.concatenate([freqs, freqs])[None, :]                    # (1, 2*half)
    phase = jnp.concatenate(
        [jnp.zeros((half,), jnp.float32),
         jnp.full((half,), -0.5 * math.pi, jnp.float32)])[None, :]   # (1, 2*half)

    # Per-row per-buffer VMEM: output row + t column padded to 128-lane vregs.
    row_bytes = width * out_bytes + 128 * 4
    tile, steps = _choose_tile_and_steps(n, row_bytes, vmem_budget_bytes)
    n_pad = tile * steps

    t2d = t_flat.astype(jnp.float32).reshape(n, 1)                   # (N, 1)
    if n_pad != n:
        t2d = jnp.pad(t2d, ((0, n_pad - n), (0, 0)))                 # host-side glue

    cost = pl.CostEstimate(
        flops=2 * n_pad * width,                     # mul + phase add
        transcendentals=n_pad * width,               # single fused cos pass
        bytes_accessed=n_pad * 4 + 2 * width * 4 + n_pad * width * out_bytes,
    )

    emb = pl.pallas_call(
        _timestep_embed_kernel,
        out_shape=jax.ShapeDtypeStruct((n_pad, width), out_dtype),
        grid=(steps,),
        in_specs=[
            pl.BlockSpec((tile, 1), lambda i: (i, 0)),       # t rows, streamed
            pl.BlockSpec((1, width), lambda i: (0, 0)),      # [f|f], resident
            pl.BlockSpec((1, width), lambda i: (0, 0)),      # phase, resident
        ],
        out_specs=pl.BlockSpec((tile, width), lambda i: (i, 0)),
        compiler_params=pltpu.CompilerParams(
            dimension_semantics=("parallel",),               # rows independent
        ),
        cost_estimate=cost,
    )(t2d, f2, phase)

    if n_pad != n:
        emb = emb[:n]
    if outdim % 2:
        # reference pads one zero column when outdim is odd (glue, not hot path)
        emb = jnp.pad(emb, ((0, 0), (0, 1)))
    return emb


def concat_timestep_embedder_nd(x, outdim, num_features=None,
                                add_sequence_dim=False,
                                out_dtype=jnp.float32):
    """Forward pass of ConcatTimestepEmbedderND.

    x: (B,) or (B, D) array of scalar conditioning values.
    returns: (B, D*outdim), or (B, 1, D*outdim) if add_sequence_dim.
    """
    if x.ndim == 1:
        x = x[:, None]
    assert x.ndim == 2
    b, dims = x.shape
    assert num_features is None or dims == num_features

    t_flat = x.reshape(b * dims)                              # 'b d -> (b d)'
    emb = timestep_embedding_pallas(t_flat, outdim, out_dtype=out_dtype)
    emb = emb.reshape(b, dims * outdim)                       # '(b d) d2 -> b (d d2)'
    if add_sequence_dim:
        emb = emb[:, None]
    return emb


def _reference(x, outdim, max_period=10000.0):
    # pure-JAX reference of the PyTorch semantics, for in-script validation
    if x.ndim == 1:
        x = x[:, None]
    b, dims = x.shape
    t = x.reshape(b * dims).astype(jnp.float32)
    half = outdim // 2
    freqs = jnp.exp(
        -math.log(max_period) * jnp.arange(half, dtype=jnp.float32) / half)
    args = t[:, None] * freqs[None, :]
    emb = jnp.concatenate([jnp.cos(args), jnp.sin(args)], axis=-1)
    if outdim % 2:
        emb = jnp.pad(emb, ((0, 0), (0, 1)))
    return emb.reshape(b, dims * outdim)


if __name__ == "__main__":
    # ConcatTimestepEmbedderND has no learnable parameters (Timestep is a fixed
    # sinusoidal embedding), so nothing to initialize beyond the freq tables.
    B, D, OUTDIM = 2, 4, 256          # outdim=256 -> 2*half=256 (lane aligned)

    key = jax.random.PRNGKey(0)
    x = jax.random.uniform(key, (B, D), dtype=jnp.float32) * 1000.0

    out = concat_timestep_embedder_nd(
        x, outdim=OUTDIM, num_features=D, add_sequence_dim=False)
    out = jax.block_until_ready(out)

    ref = _reference(x, OUTDIM)
    assert out.shape == (B, D * OUTDIM), out.shape
    assert out.dtype == jnp.float32
    # atol=1e-4: the fused sin(x)=cos(x-pi/2) phase add perturbs the f32
    # argument by <= 0.5 ulp(arg) (~3e-5 for t*f ~ 1e3); see header comment.
    assert jnp.allclose(out, ref, atol=1e-4, rtol=1e-4)

    # add_sequence_dim path
    out_seq = jax.block_until_ready(
        concat_timestep_embedder_nd(x, outdim=OUTDIM, num_features=D,
                                    add_sequence_dim=True))
    assert out_seq.shape == (B, 1, D * OUTDIM)

    # larger, multi-tile case (N = 4096 rows -> balanced 2-step grid, which
    # also exercises the >=2-step path that keeps both v7x TensorCores busy)
    xl = jax.random.uniform(jax.random.PRNGKey(1), (256, 16),
                            dtype=jnp.float32) * 1000.0
    out_l = jax.block_until_ready(concat_timestep_embedder_nd(xl, OUTDIM))
    ref_l = _reference(xl, OUTDIM)
    assert jnp.allclose(out_l, ref_l, atol=1e-4, rtol=1e-4)

    # bf16 output gate (halves HBM writeback where downstream accepts it);
    # math stays f32 in-kernel, only the final store casts.
    out_bf = jax.block_until_ready(
        concat_timestep_embedder_nd(x, outdim=OUTDIM, num_features=D,
                                    out_dtype=jnp.bfloat16))
    assert out_bf.dtype == jnp.bfloat16
    assert jnp.allclose(out_bf.astype(jnp.float32), ref, atol=2e-2, rtol=2e-2)

    print("KERNEL_OK")
</pallas_src>

<mosaic_0001>
module attributes {stable_mosaic.version = 11 : i64} {
  func.func @_timestep_embed_kernel(%arg0: i32, %arg1: memref<8x1xf32, #tpu.memory_space<vmem>>, %arg2: memref<1x256xf32, #tpu.memory_space<vmem>>, %arg3: memref<1x256xf32, #tpu.memory_space<vmem>>, %arg4: memref<8x256xf32, #tpu.memory_space<vmem>>) attributes {dimension_semantics = [#tpu.dimension_semantics<parallel>], iteration_bounds = array<i64: 1>, scalar_prefetch = 0 : i64, scratch_operands = 0 : i64, tpu.core_type = #tpu.core_type<tc>, window_params = [{transform_indices = @transform_0, window_bounds = array<i64: 8, 1>}, {pipeline_mode = #tpu.pipeline_mode<synchronous>, transform_indices = @transform_1, window_bounds = array<i64: 1, 256>}, {pipeline_mode = #tpu.pipeline_mode<synchronous>, transform_indices = @transform_2, window_bounds = array<i64: 1, 256>}, {transform_indices = @transform_3, window_bounds = array<i64: 8, 256>}]} {
    %c0 = arith.constant 0 : index
    %c0_0 = arith.constant 0 : index
    %0 = vector.load %arg1[%c0, %c0_0] : memref<8x1xf32, #tpu.memory_space<vmem>>, vector<8x1xf32>
    %c0_1 = arith.constant 0 : index
    %c0_2 = arith.constant 0 : index
    %1 = vector.load %arg2[%c0_1, %c0_2] : memref<1x256xf32, #tpu.memory_space<vmem>>, vector<1x256xf32>
    %2 = vector.broadcast %0 : vector<8x1xf32> to vector<8x256xf32>
    %3 = vector.broadcast %1 : vector<1x256xf32> to vector<8x256xf32>
    %4 = arith.mulf %2, %3 : vector<8x256xf32>
    %c0_3 = arith.constant 0 : index
    %c0_4 = arith.constant 0 : index
    %5 = vector.load %arg3[%c0_3, %c0_4] : memref<1x256xf32, #tpu.memory_space<vmem>>, vector<1x256xf32>
    %6 = vector.broadcast %5 : vector<1x256xf32> to vector<8x256xf32>
    %7 = arith.addf %4, %6 : vector<8x256xf32>
    %8 = math.cos %7 : vector<8x256xf32>
    %c0_5 = arith.constant 0 : index
    %c0_6 = arith.constant 0 : index
    %9 = vector.load %arg4[%c0_5, %c0_6] : memref<8x256xf32, #tpu.memory_space<vmem>>, vector<8x256xf32>
    tpu.vector_store %arg4[%c0_5, %c0_6], %8 {strides = array<i32>} : memref<8x256xf32, #tpu.memory_space<vmem>>, vector<8x256xf32>,
    return
  }
  func.func @transform_0(%arg0: i32) -> (i32, i32) {
    %c0_i32 = arith.constant 0 : i32
    %c0_i32_0 = arith.constant 0 : i32
    return %arg0, %c0_i32 : i32, i32
  }
  func.func @transform_1(%arg0: i32) -> (i32, i32) {
    %c0_i32 = arith.constant 0 : i32
    %c0_i32_0 = arith.constant 0 : i32
    %c0_i32_1 = arith.constant 0 : i32
    return %c0_i32, %c0_i32_0 : i32, i32
  }
  func.func @transform_2(%arg0: i32) -> (i32, i32) {
    %c0_i32 = arith.constant 0 : i32
    %c0_i32_0 = arith.constant 0 : i32
    %c0_i32_1 = arith.constant 0 : i32
    return %c0_i32, %c0_i32_0 : i32, i32
  }
  func.func @transform_3(%arg0: i32) -> (i32, i32) {
    %c0_i32 = arith.constant 0 : i32
    %c0_i32_0 = arith.constant 0 : i32
    return %arg0, %c0_i32 : i32, i32
  }
}

</mosaic_0001>

<llo_original>
// kernel: tpu_custom_call.1
$region0: #{tpu_custom_call.1}
  #allocation0 [shape = 'u32[]', space=smem, size = 0x4, offset = 0x4, fixed_abs, tag = 'smem constant byte address 0x4 - core index']
  #allocation1 [shape = 'u32[144,128]{1,0:T(1,128)}', space=vmem, size = 0x12000, scoped, tag = 'internal scratch']
  %s0 = inlined_call_operand.vmem [shape: f32[8,1], index: 0, kind: input, shape index: {}]
  %s1 = inlined_call_operand.vmem [shape: f32[1,256], index: 1, kind: input, shape index: {}]
  %s2 = inlined_call_operand.vmem [shape: f32[1,256], index: 2, kind: input, shape index: {}]
  %s3 = inlined_call_operand.hbm [shape: f32[8,256], index: 3, kind: output, shape index: {}]
  %s4 = sld [smem:[#allocation0]]
  $region22: #{tpu_custom_call.1} parent=0
    _
  %s6 = ssub.s32 1, %s4
  %s7 = scalar_select 0, %s6, %s4
  $region1: #{tpu_custom_call.1} parent=0
    #allocation2 [shape = 'u8[8192]{0}', space=vmem, size = 0x2000, scoped, tag = 'output window, operand 0, single buffered']
    #allocation3 [shape = 's32[1]{0}', space=sflag, size = 0x4, scoped, tag = 'scoped memory for tpu_custom_call.1']
    %8 = vsyncpa [#allocation3], 0
    // Predicated region
    $region2: #{tpu_custom_call.1} parent=1 // pred_check
      _
    $region3: #{tpu_custom_call.1} parent=1 // pred_check_branch
      %10 = sbr.rel (0) target = $region5
    $region4: #{tpu_custom_call.1} parent=1 // pred_region
      _
    $region5: #{tpu_custom_call.1} parent=1 // pred_fallthru
      _
    // Predicated region
    $region6: #{tpu_custom_call.1} parent=1 // pred_check
      _
    $region7: #{tpu_custom_call.1} parent=1 // pred_check_branch
      %12 = sbr.rel (0) target = $region9
    $region8: #{tpu_custom_call.1} parent=1 // pred_region
      _
    $region9: #{tpu_custom_call.1} parent=1 // pred_fallthru
      _
    // Predicated region
    $region10: #{tpu_custom_call.1} parent=1 // pred_check
      _
    $region11: #{tpu_custom_call.1} parent=1 // pred_check_branch
      %14 = sbr.rel (0) target = $region13
    $region12: #{tpu_custom_call.1} parent=1 // pred_region
      _
    $region13: #{tpu_custom_call.1} parent=1 // pred_fallthru
      _
    %v15 = vld [vmem:[%s0] sm:$0xff]
    %v16 = vld [vmem:[%s1] sm:$0x3]
    %18 = vset.pattern.permute.xlu0 0
    %19 = vperm.xlu0 %18, %v15
    %v20 = vpop.permute.xlu0 %19
    %v23 = vlaneseq
    %v24 = vshrl.u32 %v23, 7
    %v25 = vsub.s32 0, %v24
    %v26 = vrot.slane %v16, %v25
    %v27 = vlaneseq
    %v28 = vshrl.u32 %v27, 7
    %v29 = vsub.s32 1, %v28
    %v30 = vrot.slane %v16, %v29
    %v33 = vmul.f32 %v20, %v26
    %v34 = vmul.f32 %v20, %v30
    %v35 = vld [vmem:[%s2] sm:$0x3]
    %v37 = vlaneseq
    %v38 = vshrl.u32 %v37, 7
    %v39 = vsub.s32 0, %v38
    %v40 = vrot.slane %v35, %v39
    %v41 = vlaneseq
    %v42 = vshrl.u32 %v41, 7
    %v43 = vsub.s32 1, %v42
    %v44 = vrot.slane %v35, %v43
    %v47 = vadd.f32 %v33, %v40
    %v48 = vadd.f32 %v34, %v44
    %v49 = vand.u32 2147483647, %v47
    %vm50 = vcmp.le.f32.partialorder %v49, 0.7853982
    %vm51 = vcmp.lt.s32.totalorder %v47, 0
    %v52 = vand.u32 %v47, 2139095040
    %v53 = vshrl.u32 %v52, 23
    %v54 = vsub.s32 %v53, 127
    %v55 = vand.u32 2147483647, %v47
    %v56 = vand.u32 %v55, 8388607
    %v57 = vor.u32 %v56, 8388608
    %v58 = vsub.s32 0, %v57
    %v59 = vadd.s32 %v54, 1
    %vm60 = vcmp.gt.s32.totalorder %v59, 0
    %v61 = vsel %vm60, %v59, 0
    %v62 = vshrl.u32 %v61, 5
    %v63 = vand.u32 %v61, 31
    %v64 = vsub.s32 32, %v63
    %v65 = vshrl.u32 683565275, %v64
    %v66 = vshll.u32 683565275, %v63
    %v67 = vshrl.u32 2475754826, %v64
    %v68 = vor.u32 %v66, %v67
    %v69 = vshll.u32 2475754826, %v63
    %v70 = vshrl.u32 2131351028, %v64
    %v71 = vor.u32 %v69, %v70
    %v72 = vshll.u32 2131351028, %v63
    %v73 = vshrl.u32 2102212464, %v64
    %v74 = vor.u32 %v72, %v73
    %v75 = vshll.u32 2102212464, %v63
    %v76 = vshrl.u32 920167782, %v64
    %v77 = vor.u32 %v75, %v76
    %v78 = vshll.u32 920167782, %v63
    %v79 = vshrl.u32 1326507024, %v64
    %v80 = vor.u32 %v78, %v79
    %vm81 = vcmp.lt.s32.totalorder %v62, 1
    %vm82 = vcmp.lt.s32.totalorder %v62, 2
    %vm83 = vcmp.lt.s32.totalorder %v62, 3
    %vm84 = vcmp.lt.s32.totalorder %v62, 4
    %v85 = vsel %vm81, %v65, %v68
    %v86 = vsel %vm84, %v74, 2102212464
    %v87 = vsel %vm83, %v71, %v86
    %v88 = vsel %vm82, %v85, %v87
    %v89 = vsel %vm81, %v68, %v71
    %v90 = vsel %vm84, %v77, 920167782
    %v91 = vsel %vm83, %v74, %v90
    %v92 = vsel %vm82, %v89, %v91
    %v93 = vsel %vm81, %v71, %v74
    %v94 = vsel %vm84, %v80, 1326507024
    %v95 = vsel %vm83, %v77, %v94
    %v96 = vsel %vm82, %v93, %v95
    %v97 = vshll.u32 %v57, 8
    %v98 = vmul.u32.u64.compose %v97, %v96
    %v99 = vextract.low.u32 %v98
    %v100 = vextract.high.u32 %v98
    %v101 = vmul.u32.u64.compose %v97, %v92
    %v102 = vextract.low.u32 %v101
    %v103 = vextract.high.u32 %v101
    %v104 = vmul.u32 %v97, %v88
    %v105 = vadd.s32 %v100, %v102
    %vm106 = vc.u32 %v100, %v102
    %v107 = vadd.s32 %v103, 1
    %v108 = vsel %vm106, %v107, %v103
    %v109 = vadd.s32 %v104, %v108
    %v110 = vadd.s32 %v109, 536870912
    %v111 = vshrl.u32 %v110, 30
    %v112 = vshll.u32 %v111, 30
    %v113 = vsub.s32 %v109, %v112
    %vm114 = vcmp.lt.s32.totalorder %v113, 0
    %v115 = vsub.s32 0, %v113
    %v116 = vsel %vm114, %v115, %v113
    %v117 = vclz %v116
    %v118 = vsub.s32 %v117, 2
    %vm119 = vcmp.gt.s32.totalorder 0, %v118
    %v120 = vsel %vm119, 0, %v118
    %v121 = vsub.s32 32, %v120
    %v122 = vshll.u32 %v113, %v120
    %v123 = vshrl.u32 %v105, %v121
    %v124 = vor.u32 %v122, %v123
    %v125 = vsub.s32 4294967266, %v120
    %v126 = vadd.s32 %v125, 127
    %v127 = vshll.u32 %v126, 23
    %v128 = vor.u32 4788187, %v127
    %v129 = vand.u32 2147483647, %v128
    %v131 = vcvt.s32.f32 %v124
    %v132 = vmul.f32 %v131, %v129
    %v133 = vxor.u32 %v132, 2147483648
    %v134 = vsel %vm51, %v133, %v132
    %v135 = vsub.s32 4, %v111
    %v136 = vsel %vm51, %v135, %v111
    %v137 = vsel %vm50, %v47, %v134
    %v138 = vsel %vm50, 0, %v136
    %v139 = vcosq.f32.pop %v137
    %v140 = vsinq.f32.pop %v137
    %vm141 = vweird.f32 %v47
    %v142 = vand.u32 %v138, 3
    %vm143 = vcmp.lt.s32.totalorder %v142, 2
    %vm144 = vcmp.eq.s32.totalorder %v142, 0
    %v145 = vxor.u32 %v140, 2147483648
    %v146 = vsel %vm144, %v139, %v145
    %vm147 = vcmp.eq.s32.totalorder %v142, 2
    %v148 = vxor.u32 %v139, 2147483648
    %v149 = vsel %vm147, %v148, %v140
    %v150 = vsel %vm143, %v146, %v149
    %v151 = vsel %vm141, nan, %v150
    %v152 = vand.u32 2147483647, %v48
    %vm153 = vcmp.le.f32.partialorder %v152, 0.7853982
    %vm154 = vcmp.lt.s32.totalorder %v48, 0
    %v155 = vand.u32 %v48, 2139095040
    %v156 = vshrl.u32 %v155, 23
    %v157 = vsub.s32 %v156, 127
    %v158 = vand.u32 2147483647, %v48
    %v159 = vand.u32 %v158, 8388607
    %v160 = vor.u32 %v159, 8388608
    %v161 = vsub.s32 0, %v160
    %v162 = vadd.s32 %v157, 1
    %vm163 = vcmp.gt.s32.totalorder %v162, 0
    %v164 = vsel %vm163, %v162, 0
    %v165 = vshrl.u32 %v164, 5
    %v166 = vand.u32 %v164, 31
    %v167 = vsub.s32 32, %v166
    %v168 = vshrl.u32 683565275, %v167
    %v169 = vshll.u32 683565275, %v166
    %v170 = vshrl.u32 2475754826, %v167
    %v171 = vor.u32 %v169, %v170
    %v172 = vshll.u32 2475754826, %v166
    %v173 = vshrl.u32 2131351028, %v167
    %v174 = vor.u32 %v172, %v173
    %v175 = vshll.u32 2131351028, %v166
    %v176 = vshrl.u32 2102212464, %v167
    %v177 = vor.u32 %v175, %v176
    %v178 = vshll.u32 2102212464, %v166
    %v179 = vshrl.u32 920167782, %v167
    %v180 = vor.u32 %v178, %v179
    %v181 = vshll.u32 920167782, %v166
    %v182 = vshrl.u32 1326507024, %v167
    %v183 = vor.u32 %v181, %v182
    %vm184 = vcmp.lt.s32.totalorder %v165, 1
    %vm185 = vcmp.lt.s32.totalorder %v165, 2
    %vm186 = vcmp.lt.s32.totalorder %v165, 3
    %vm187 = vcmp.lt.s32.totalorder %v165, 4
    %v188 = vsel %vm184, %v168, %v171
    %v189 = vsel %vm187, %v177, 2102212464
    %v190 = vsel %vm186, %v174, %v189
    %v191 = vsel %vm185, %v188, %v190
    %v192 = vsel %vm184, %v171, %v174
    %v193 = vsel %vm187, %v180, 920167782
    %v194 = vsel %vm186, %v177, %v193
    %v195 = vsel %vm185, %v192, %v194
    %v196 = vsel %vm184, %v174, %v177
    %v197 = vsel %vm187, %v183, 1326507024
    %v198 = vsel %vm186, %v180, %v197
    %v199 = vsel %vm185, %v196, %v198
    %v200 = vshll.u32 %v160, 8
    %v201 = vmul.u32.u64.compose %v200, %v199
    %v202 = vextract.low.u32 %v201
    %v203 = vextract.high.u32 %v201
    %v204 = vmul.u32.u64.compose %v200, %v195
    %v205 = vextract.low.u32 %v204
    %v206 = vextract.high.u32 %v204
    %v207 = vmul.u32 %v200, %v191
    %v208 = vadd.s32 %v203, %v205
    %vm209 = vc.u32 %v203, %v205
    %v210 = vadd.s32 %v206, 1
    %v211 = vsel %vm209, %v210, %v206
    %v212 = vadd.s32 %v207, %v211
    %v213 = vadd.s32 %v212, 536870912
    %v214 = vshrl.u32 %v213, 30
    %v215 = vshll.u32 %v214, 30
    %v216 = vsub.s32 %v212, %v215
    %vm217 = vcmp.lt.s32.totalorder %v216, 0
    %v218 = vsub.s32 0, %v216
    %v219 = vsel %vm217, %v218, %v216
    %v220 = vclz %v219
    %v221 = vsub.s32 %v220, 2
    %vm222 = vcmp.gt.s32.totalorder 0, %v221
    %v223 = vsel %vm222, 0, %v221
    %v224 = vsub.s32 32, %v223
    %v225 = vshll.u32 %v216, %v223
    %v226 = vshrl.u32 %v208, %v224
    %v227 = vor.u32 %v225, %v226
    %v228 = vsub.s32 4294967266, %v223
    %v229 = vadd.s32 %v228, 127
    %v230 = vshll.u32 %v229, 23
    %v231 = vor.u32 4788187, %v230
    %v232 = vand.u32 2147483647, %v231
    %v234 = vcvt.s32.f32 %v227
    %v235 = vmul.f32 %v234, %v232
    %v236 = vxor.u32 %v235, 2147483648
    %v237 = vsel %vm154, %v236, %v235
    %v238 = vsub.s32 4, %v214
    %v239 = vsel %vm154, %v238, %v214
    %v240 = vsel %vm153, %v48, %v237
    %v241 = vsel %vm153, 0, %v239
    %v242 = vcosq.f32.pop %v240
    %v243 = vsinq.f32.pop %v240
    %vm244 = vweird.f32 %v48
    %v245 = vand.u32 %v241, 3
    %vm246 = vcmp.lt.s32.totalorder %v245, 2
    %vm247 = vcmp.eq.s32.totalorder %v245, 0
    %v248 = vxor.u32 %v243, 2147483648
    %v249 = vsel %vm247, %v242, %v248
    %vm250 = vcmp.eq.s32.totalorder %v245, 2
    %v251 = vxor.u32 %v242, 2147483648
    %v252 = vsel %vm250, %v251, %v243
    %v253 = vsel %vm246, %v249, %v252
    %v254 = vsel %vm244, nan, %v253
    %255 = vst [vmem:[#allocation2] sm:$0xff] %v151
    %256 = vst [vmem:[#allocation2 + $0x8] sm:$0xff] %v254
    // Predicated region
    $region14: #{tpu_custom_call.1} parent=1 // pred_check
      _
    $region15: #{tpu_custom_call.1} parent=1 // pred_check_branch
      %258 = sbr.rel (0) target = $region17
    $region16: #{tpu_custom_call.1} parent=1 // pred_region
      %s260 = ssub.s32 256, 256
      %261 = vsyncadd [#allocation3], %s260
      %s263 = sshll.u32 [#allocation2], 4
      %s264 = int_to_ptr.vmem [resolvable:$true] %s263
      %266 = dma.vmem_to_hbm [thread:$0]  %s264, 256, %s3, [#allocation3]
    $region17: #{tpu_custom_call.1} parent=1 // pred_fallthru
      _
    // Predicated region
    $region18: #{tpu_custom_call.1} parent=1 // pred_check
      _
    $region19: #{tpu_custom_call.1} parent=1 // pred_check_branch
      %268 = sbr.rel (0) target = $region21
    $region20: #{tpu_custom_call.1} parent=1 // pred_region
      %269 = dma.done [#allocation3], 256
    $region21: #{tpu_custom_call.1} parent=1 // pred_fallthru
      _
    %270 = vsyncpa [#allocation3], 1

</llo_original>
